<compile_context>
chip_gen: v7x
topology: tpu7x:2x2x1
jax: 0.10.0
libtpu: 0.0.40
codegen_flags: <defaults>
</compile_context>

<pallas_src>
import functools
import math

import jax
import jax.numpy as jnp
from jax.experimental import pallas as pl
from jax.experimental.pallas import tpu as pltpu


def _round_up(x, m):
    return ((x + m - 1) // m) * m


def _num_tensorcores_per_chip():
    """2 on v7x (megacore), 1 on v5e/v6e.  Defensive: default to 1."""
    try:
        kind = (jax.devices()[0].device_kind or "").lower()
        if "v7" in kind:
            return 2
    except Exception:
        pass
    return 1


def _default_compute_dtype():
    """bf16 matmul operands on TPU (bf16-native MXU on all generations)."""
    try:
        if jax.default_backend() == "tpu":
            return jnp.bfloat16
    except Exception:
        pass
    return jnp.float32


def _choose_batch_tile(B, num_tc):
    """Pick a batch tile per the MXU / pipeline-overhead / megacore guidance."""
    if num_tc >= 2 and B >= 256:
        # v7x: make sure both TensorCores get work.
        if B >= 2048:
            return 1024          # >= 2 steps, amortizes per-step overhead
        if B > 1024:
            return 512           # >= 3 steps
        return _round_up(-(-B // 2), 128)   # exactly 2 steps -> one per TC
    # Single TensorCore (v5e/v6e) or tiny batch: avoid per-step overhead.
    if B <= 512:
        return _round_up(B, 16)  # one grid step (16-aligned sublanes for bf16)
    if B <= 1024:
        return _round_up(-(-B // 2), 128)
    if B >= 2048:
        return 1024
    return 512


def actor_kernel(x_ref, w1_ref, b1_ref, w2_ref, b2_ref, w3_ref, b3_ref,
                 o_ref, *, act_limit, act_rows):
    """Full forward pass (3 matmuls + ReLU/ReLU/tanh + scale) for one batch tile.

    Matmul operands are in the weight dtype (bf16 by default, f32 optional);
    accumulation and all elementwise math are f32.  The output is stored
    TRANSPOSED: (act_rows sublanes, batch_tile lanes).
    """
    x = x_ref[...]                                    # already compute dtype

    h1 = jnp.dot(x, w1_ref[...], preferred_element_type=jnp.float32)
    h1 = jnp.maximum(h1 + b1_ref[...], 0.0)           # bias + ReLU in f32 (VPU)

    h2 = jnp.dot(h1.astype(w2_ref.dtype), w2_ref[...],
                 preferred_element_type=jnp.float32)
    h2 = jnp.maximum(h2 + b2_ref[...], 0.0)           # bias + ReLU in f32 (VPU)

    a = jnp.dot(h2.astype(w3_ref.dtype), w3_ref[...],
                preferred_element_type=jnp.float32)   # (bt, 128) padded cols=0
    a = jnp.tanh(a + b3_ref[...]) * act_limit         # tanh (EUP), f32

    # Transpose (XLU) and keep only the real action rows -> small, lane-dense
    # (lanes = batch tile) output block.
    o_ref[...] = a.T[:act_rows, :].astype(o_ref.dtype)


def actor_forward(x, params, act_limit, *, batch_tile=None,
                  compute_dtype=None, interpret=False):
    """Run the Actor MLP as a single fused Pallas kernel, tiled over the batch.

    params = (w1, b1, w2, b2, w3, b3) with weights stored as [in, out]
    (transposed vs. PyTorch nn.Linear) and biases as [1, out].
    """
    w1, b1, w2, b2, w3, b3 = params
    B, obs_dim = x.shape
    hidden = w1.shape[1]
    act_dim = w3.shape[1]

    if compute_dtype is None:
        compute_dtype = _default_compute_dtype()

    # ---- Wrapper-side layout plumbing (padding only; all math is in-kernel).
    # Last matmul N padded to 128 so the MXU pass / layout is clean; the real
    # columns are recovered by the in-kernel transpose + act_rows slice.
    act_dim_mxu = max(_round_up(act_dim, 128), 128)
    if act_dim_mxu != act_dim:
        w3 = jnp.pad(w3, ((0, 0), (0, act_dim_mxu - act_dim)))
        b3 = jnp.pad(b3, ((0, 0), (0, act_dim_mxu - act_dim)))
    # Output rows (sublanes) only padded to a multiple of 8.
    act_rows = max(_round_up(act_dim, 8), 8)

    # Batch tiling / padding.
    if batch_tile is None:
        batch_tile = _choose_batch_tile(B, _num_tensorcores_per_chip())
    B_p = _round_up(B, batch_tile)
    x = x.astype(compute_dtype)
    if B_p != B:
        x = jnp.pad(x, ((0, B_p - B), (0, 0)))

    # Matmul operands in compute_dtype (bf16 default -> halves weight DMA).
    w1 = w1.astype(compute_dtype)
    w2 = w2.astype(compute_dtype)
    w3 = w3.astype(compute_dtype)
    # Biases / elementwise math stay f32 (no bf16 VPU/EUP on v5e).
    b1 = b1.astype(jnp.float32)
    b2 = b2.astype(jnp.float32)
    b3 = b3.astype(jnp.float32)

    kernel = functools.partial(actor_kernel, act_limit=float(act_limit),
                               act_rows=act_rows)
    grid = (B_p // batch_tile,)

    out_t = pl.pallas_call(
        kernel,
        out_shape=jax.ShapeDtypeStruct((act_rows, B_p), jnp.float32),
        grid_spec=pltpu.PrefetchScalarGridSpec(
            num_scalar_prefetch=0,
            grid=grid,
            in_specs=[
                # batch-tiled observations
                pl.BlockSpec((batch_tile, obs_dim), lambda i: (i, 0)),
                # weights / biases: constant index_map -> stay VMEM-resident,
                # Pallas skips re-DMA on later grid steps.
                pl.BlockSpec((obs_dim, hidden), lambda i: (0, 0)),
                pl.BlockSpec((1, hidden), lambda i: (0, 0)),
                pl.BlockSpec((hidden, hidden), lambda i: (0, 0)),
                pl.BlockSpec((1, hidden), lambda i: (0, 0)),
                pl.BlockSpec((hidden, act_dim_mxu), lambda i: (0, 0)),
                pl.BlockSpec((1, act_dim_mxu), lambda i: (0, 0)),
            ],
            # Transposed output: (act_rows, batch_tile) per step.
            out_specs=pl.BlockSpec((act_rows, batch_tile), lambda i: (0, i)),
        ),
        compiler_params=pltpu.CompilerParams(
            dimension_semantics=("parallel",),   # megacore-shardable on v7x
            vmem_limit_bytes=32 * 1024 * 1024,   # plenty for batch_tile=1024
        ),
        interpret=interpret,
    )(x, w1, b1, w2, b2, w3, b3)

    # Strip action/batch padding and undo the transpose outside the kernel
    # (this only touches the small real buffer: act_dim x B floats).
    return out_t[:act_dim, :B].T


def init_actor_params(key, obs_dim, act_dim, hidden=256, dtype=jnp.float32):
    """Deterministic init mimicking PyTorch nn.Linear (uniform +/- 1/sqrt(fan_in)).

    Weights are returned as [in, out] (transposed vs. torch) for x @ W."""
    keys = jax.random.split(key, 6)

    def linear(kw, kb, fan_in, fan_out):
        bound = 1.0 / math.sqrt(fan_in)
        w = jax.random.uniform(kw, (fan_in, fan_out), dtype, -bound, bound)
        b = jax.random.uniform(kb, (1, fan_out), dtype, -bound, bound)
        return w, b

    w1, b1 = linear(keys[0], keys[1], obs_dim, hidden)
    w2, b2 = linear(keys[2], keys[3], hidden, hidden)
    w3, b3 = linear(keys[4], keys[5], hidden, act_dim)
    return (w1, b1, w2, b2, w3, b3)


def actor_ref(x, params, act_limit):
    """Pure-JAX f32 reference for correctness checking."""
    w1, b1, w2, b2, w3, b3 = params
    h = jax.nn.relu(x @ w1 + b1)
    h = jax.nn.relu(h @ w2 + b2)
    return jnp.tanh(h @ w3 + b3) * act_limit


if __name__ == "__main__":
    key = jax.random.PRNGKey(0)
    k_param, k_x = jax.random.split(key)

    obs_dim, act_dim, act_limit = 32, 8, 2.0
    batch = 8

    params = init_actor_params(k_param, obs_dim, act_dim)
    x = jax.random.normal(k_x, (batch, obs_dim), dtype=jnp.float32)
    ref = actor_ref(x, params, act_limit)

    # 1) Default path (bf16 matmul operands on TPU, f32 accumulation).
    out = jax.block_until_ready(actor_forward(x, params, act_limit))
    assert out.shape == (batch, act_dim)
    assert jnp.allclose(out, ref, atol=5e-2, rtol=0.0), "mismatch (default dtype)"

    # 2) Exact f32 path matches the PyTorch semantics tightly.
    out_f32 = jax.block_until_ready(
        actor_forward(x, params, act_limit, compute_dtype=jnp.float32))
    assert jnp.allclose(out_f32, ref, atol=1e-5, rtol=1e-5), "mismatch (f32)"

    # 3) Batch-padding path (non-multiple-of-8 batch).
    x2 = jax.random.normal(jax.random.PRNGKey(1), (5, obs_dim), jnp.float32)
    out2 = jax.block_until_ready(
        actor_forward(x2, params, act_limit, compute_dtype=jnp.float32))
    ref2 = actor_ref(x2, params, act_limit)
    assert out2.shape == (5, act_dim)
    assert jnp.allclose(out2, ref2, atol=1e-5, rtol=1e-5), "mismatch (padded batch)"

    # 4) Multi-step grid path (explicit small tile to force several steps).
    x3 = jax.random.normal(jax.random.PRNGKey(2), (300, obs_dim), jnp.float32)
    out3 = jax.block_until_ready(
        actor_forward(x3, params, act_limit, batch_tile=128,
                      compute_dtype=jnp.float32))
    ref3 = actor_ref(x3, params, act_limit)
    assert out3.shape == (300, act_dim)
    assert jnp.allclose(out3, ref3, atol=1e-5, rtol=1e-5), "mismatch (multi-step)"

    print("KERNEL_OK")
</pallas_src>

<mosaic_0001>
module attributes {stable_mosaic.version = 11 : i64} {
  func.func @actor_kernel(%arg0: i32, %arg1: memref<16x32xf32, #tpu.memory_space<vmem>>, %arg2: memref<32x256xf32, #tpu.memory_space<vmem>>, %arg3: memref<1x256xf32, #tpu.memory_space<vmem>>, %arg4: memref<256x256xf32, #tpu.memory_space<vmem>>, %arg5: memref<1x256xf32, #tpu.memory_space<vmem>>, %arg6: memref<256x128xf32, #tpu.memory_space<vmem>>, %arg7: memref<1x128xf32, #tpu.memory_space<vmem>>, %arg8: memref<8x16xf32, #tpu.memory_space<vmem>>) attributes {dimension_semantics = [#tpu.dimension_semantics<parallel>], iteration_bounds = array<i64: 1>, scalar_prefetch = 0 : i64, scratch_operands = 0 : i64, tpu.core_type = #tpu.core_type<tc>, window_params = [{transform_indices = @transform_0, window_bounds = array<i64: 16, 32>}, {pipeline_mode = #tpu.pipeline_mode<synchronous>, transform_indices = @transform_1, window_bounds = array<i64: 32, 256>}, {pipeline_mode = #tpu.pipeline_mode<synchronous>, transform_indices = @transform_2, window_bounds = array<i64: 1, 256>}, {pipeline_mode = #tpu.pipeline_mode<synchronous>, transform_indices = @transform_3, window_bounds = array<i64: 256, 256>}, {pipeline_mode = #tpu.pipeline_mode<synchronous>, transform_indices = @transform_4, window_bounds = array<i64: 1, 256>}, {pipeline_mode = #tpu.pipeline_mode<synchronous>, transform_indices = @transform_5, window_bounds = array<i64: 256, 128>}, {pipeline_mode = #tpu.pipeline_mode<synchronous>, transform_indices = @transform_6, window_bounds = array<i64: 1, 128>}, {transform_indices = @transform_7, window_bounds = array<i64: 8, 16>}]} {
    %c0 = arith.constant 0 : index
    %c0_0 = arith.constant 0 : index
    %0 = vector.load %arg1[%c0, %c0_0] : memref<16x32xf32, #tpu.memory_space<vmem>>, vector<16x32xf32>
    %c0_1 = arith.constant 0 : index
    %c0_2 = arith.constant 0 : index
    %1 = vector.load %arg2[%c0_1, %c0_2] : memref<32x256xf32, #tpu.memory_space<vmem>>, vector<32x256xf32>
    %cst = arith.constant dense<0.000000e+00> : vector<16x256xf32>
    %2 = tpu.matmul %0, %1, %cst {dimension_numbers = #tpu.dot_dimension_numbers<[1], [0], [0], [1], [0, 0, 1, 1], [], []>} : vector<16x32xf32>, vector<32x256xf32>, vector<16x256xf32> -> vector<16x256xf32>
    %c0_3 = arith.constant 0 : index
    %c0_4 = arith.constant 0 : index
    %3 = vector.load %arg3[%c0_3, %c0_4] : memref<1x256xf32, #tpu.memory_space<vmem>>, vector<1x256xf32>
    %4 = vector.broadcast %3 : vector<1x256xf32> to vector<16x256xf32>
    %5 = arith.addf %2, %4 : vector<16x256xf32>
    %cst_5 = arith.constant 0.000000e+00 : f32
    %6 = vector.broadcast %cst_5 : f32 to vector<16x256xf32>
    %7 = arith.maximumf %5, %6 : vector<16x256xf32>
    %c0_6 = arith.constant 0 : index
    %c0_7 = arith.constant 0 : index
    %8 = vector.load %arg4[%c0_6, %c0_7] : memref<256x256xf32, #tpu.memory_space<vmem>>, vector<256x256xf32>
    %cst_8 = arith.constant dense<0.000000e+00> : vector<16x256xf32>
    %9 = tpu.matmul %7, %8, %cst_8 {dimension_numbers = #tpu.dot_dimension_numbers<[1], [0], [0], [1], [0, 0, 1, 1], [], []>} : vector<16x256xf32>, vector<256x256xf32>, vector<16x256xf32> -> vector<16x256xf32>
    %c0_9 = arith.constant 0 : index
    %c0_10 = arith.constant 0 : index
    %10 = vector.load %arg5[%c0_9, %c0_10] : memref<1x256xf32, #tpu.memory_space<vmem>>, vector<1x256xf32>
    %11 = vector.broadcast %10 : vector<1x256xf32> to vector<16x256xf32>
    %12 = arith.addf %9, %11 : vector<16x256xf32>
    %cst_11 = arith.constant 0.000000e+00 : f32
    %13 = vector.broadcast %cst_11 : f32 to vector<16x256xf32>
    %14 = arith.maximumf %12, %13 : vector<16x256xf32>
    %c0_12 = arith.constant 0 : index
    %c0_13 = arith.constant 0 : index
    %15 = vector.load %arg6[%c0_12, %c0_13] : memref<256x128xf32, #tpu.memory_space<vmem>>, vector<256x128xf32>
    %cst_14 = arith.constant dense<0.000000e+00> : vector<16x128xf32>
    %16 = tpu.matmul %14, %15, %cst_14 {dimension_numbers = #tpu.dot_dimension_numbers<[1], [0], [0], [1], [0, 0, 1, 1], [], []>} : vector<16x256xf32>, vector<256x128xf32>, vector<16x128xf32> -> vector<16x128xf32>
    %c0_15 = arith.constant 0 : index
    %c0_16 = arith.constant 0 : index
    %17 = vector.load %arg7[%c0_15, %c0_16] : memref<1x128xf32, #tpu.memory_space<vmem>>, vector<1x128xf32>
    %18 = vector.broadcast %17 : vector<1x128xf32> to vector<16x128xf32>
    %19 = arith.addf %16, %18 : vector<16x128xf32>
    %20 = math.tanh %19 : vector<16x128xf32>
    %cst_17 = arith.constant 2.000000e+00 : f32
    %21 = vector.broadcast %cst_17 : f32 to vector<16x128xf32>
    %22 = arith.mulf %20, %21 : vector<16x128xf32>
    %23 = tpu.transpose %22, [1, 0] : vector<16x128xf32> -> vector<128x16xf32>
    %24 = vector.extract_strided_slice %23 {offsets = [0, 0], sizes = [8, 16], strides = [1, 1]} : vector<128x16xf32> to vector<8x16xf32>
    %c0_18 = arith.constant 0 : index
    %c0_19 = arith.constant 0 : index
    %25 = vector.load %arg8[%c0_18, %c0_19] : memref<8x16xf32, #tpu.memory_space<vmem>>, vector<8x16xf32>
    tpu.vector_store %arg8[%c0_18, %c0_19], %24 {strides = array<i32>} : memref<8x16xf32, #tpu.memory_space<vmem>>, vector<8x16xf32>,
    return
  }
  func.func @transform_0(%arg0: i32) -> (i32, i32) {
    %c0_i32 = arith.constant 0 : i32
    %c0_i32_0 = arith.constant 0 : i32
    return %arg0, %c0_i32 : i32, i32
  }
  func.func @transform_1(%arg0: i32) -> (i32, i32) {
    %c0_i32 = arith.constant 0 : i32
    %c0_i32_0 = arith.constant 0 : i32
    %c0_i32_1 = arith.constant 0 : i32
    return %c0_i32, %c0_i32_0 : i32, i32
  }
  func.func @transform_2(%arg0: i32) -> (i32, i32) {
    %c0_i32 = arith.constant 0 : i32
    %c0_i32_0 = arith.constant 0 : i32
    %c0_i32_1 = arith.constant 0 : i32
    return %c0_i32, %c0_i32_0 : i32, i32
  }
  func.func @transform_3(%arg0: i32) -> (i32, i32) {
    %c0_i32 = arith.constant 0 : i32
    %c0_i32_0 = arith.constant 0 : i32
    %c0_i32_1 = arith.constant 0 : i32
    return %c0_i32, %c0_i32_0 : i32, i32
  }
  func.func @transform_4(%arg0: i32) -> (i32, i32) {
    %c0_i32 = arith.constant 0 : i32
    %c0_i32_0 = arith.constant 0 : i32
    %c0_i32_1 = arith.constant 0 : i32
    return %c0_i32, %c0_i32_0 : i32, i32
  }
  func.func @transform_5(%arg0: i32) -> (i32, i32) {
    %c0_i32 = arith.constant 0 : i32
    %c0_i32_0 = arith.constant 0 : i32
    %c0_i32_1 = arith.constant 0 : i32
    return %c0_i32, %c0_i32_0 : i32, i32
  }
  func.func @transform_6(%arg0: i32) -> (i32, i32) {
    %c0_i32 = arith.constant 0 : i32
    %c0_i32_0 = arith.constant 0 : i32
    %c0_i32_1 = arith.constant 0 : i32
    return %c0_i32, %c0_i32_0 : i32, i32
  }
  func.func @transform_7(%arg0: i32) -> (i32, i32) {
    %c0_i32 = arith.constant 0 : i32
    %c0_i32_0 = arith.constant 0 : i32
    return %c0_i32, %arg0 : i32, i32
  }
}

</mosaic_0001>

<llo_original>
// kernel: tpu_custom_call.1
$region0: #{tpu_custom_call.1}
  #allocation0 [shape = 'u32[]', space=smem, size = 0x4, offset = 0x4, fixed_abs, tag = 'smem constant byte address 0x4 - core index']
  #allocation1 [shape = 'u32[144,128]{1,0:T(1,128)}', space=vmem, size = 0x12000, scoped, tag = 'internal scratch']
  %s0 = inlined_call_operand.hbm [shape: f32[16,32], index: 0, kind: input, shape index: {}]
  %s1 = inlined_call_operand.hbm [shape: f32[32,256], index: 1, kind: input, shape index: {}]
  %s2 = inlined_call_operand.vmem [shape: f32[1,256], index: 2, kind: input, shape index: {}]
  %s3 = inlined_call_operand.hbm [shape: f32[256,256], index: 3, kind: input, shape index: {}]
  %s4 = inlined_call_operand.vmem [shape: f32[1,256], index: 4, kind: input, shape index: {}]
  %s5 = inlined_call_operand.hbm [shape: f32[256,128], index: 5, kind: input, shape index: {}]
  %s6 = inlined_call_operand.vmem [shape: f32[1,128], index: 6, kind: input, shape index: {}]
  %s7 = inlined_call_operand.hbm [shape: f32[8,16], index: 7, kind: output, shape index: {}]
  %s8 = sld [smem:[#allocation0]]
  $region54: #{tpu_custom_call.1} parent=0
    _
  %s10 = ssub.s32 1, %s8
  %s11 = scalar_select 0, %s10, %s8
  $region1: #{tpu_custom_call.1} parent=0
    #allocation2 [shape = 'u8[8192]{0}', space=vmem, size = 0x2000, scoped, tag = 'input window, operand 0, single buffered']
    #allocation3 [shape = 's32[1]{0}', space=sflag, size = 0x4, scoped, tag = 'scoped memory for tpu_custom_call.1']
    #allocation4 [shape = 's32[1]{0}', space=sflag, size = 0x4, scoped, tag = 'scoped memory for tpu_custom_call.1']
    #allocation5 [shape = 'u8[32768]{0}', space=vmem, size = 0x8000, scoped, tag = 'input window, operand 1, single buffered']
    #allocation6 [shape = 's32[1]{0}', space=sflag, size = 0x4, scoped, tag = 'scoped memory for tpu_custom_call.1']
    #allocation7 [shape = 'u8[262144]{0}', space=vmem, size = 0x40000, scoped, tag = 'input window, operand 3, single buffered']
    #allocation8 [shape = 'u8[131072]{0}', space=vmem, size = 0x20000, scoped, tag = 'input window, operand 5, single buffered']
    #allocation9 [shape = 's32[1]{0}', space=sflag, size = 0x4, scoped, tag = 'scoped memory for tpu_custom_call.1']
    #allocation10 [shape = 'u8[4096]{0}', space=vmem, size = 0x1000, scoped, tag = 'output window, operand 0, single buffered']
    %12 = vsyncpa [#allocation3], 0
    %13 = vsyncpa [#allocation6], 0
    %14 = vsyncpa [#allocation9], 0
    %15 = vsyncpa [#allocation4], 0
    // Predicated region
    $region2: #{tpu_custom_call.1} parent=1 // pred_check
      _
    $region3: #{tpu_custom_call.1} parent=1 // pred_check_branch
      %17 = sbr.rel (0) target = $region5
    $region4: #{tpu_custom_call.1} parent=1 // pred_region
      %s19 = ssub.s32 256, 256
      %20 = vsyncadd [#allocation3], %s19
      %s21 = sshll.u32 [#allocation2], 4
      %s22 = int_to_ptr.vmem [resolvable:$true] %s21
      %27 = dma.hbm_to_vmem [thread:$0]  %s0, 256, %s22, [#allocation3], 128, 128, 8
    $region5: #{tpu_custom_call.1} parent=1 // pred_fallthru
      _
    // Predicated region
    $region6: #{tpu_custom_call.1} parent=1 // pred_check
      _
    $region7: #{tpu_custom_call.1} parent=1 // pred_check_branch
      %29 = sbr.rel (0) target = $region9
    $region8: #{tpu_custom_call.1} parent=1 // pred_region
      %s31 = ssub.s32 1024, 1024
      %32 = vsyncadd [#allocation6], %s31
      %s33 = sshll.u32 [#allocation5], 4
      %s34 = int_to_ptr.vmem [resolvable:$true] %s33
      %39 = dma.hbm_to_vmem [thread:$0]  %s1, 1024, %s34, [#allocation6], 256, 256, 16
    $region9: #{tpu_custom_call.1} parent=1 // pred_fallthru
      _
    // Predicated region
    $region10: #{tpu_custom_call.1} parent=1 // pred_check
      _
    $region11: #{tpu_custom_call.1} parent=1 // pred_check_branch
      %41 = sbr.rel (0) target = $region13
    $region12: #{tpu_custom_call.1} parent=1 // pred_region
      _
    $region13: #{tpu_custom_call.1} parent=1 // pred_fallthru
      _
    // Predicated region
    $region14: #{tpu_custom_call.1} parent=1 // pred_check
      _
    $region15: #{tpu_custom_call.1} parent=1 // pred_check_branch
      %43 = sbr.rel (0) target = $region17
    $region16: #{tpu_custom_call.1} parent=1 // pred_region
      %s45 = ssub.s32 8192, 8192
      %46 = vsyncadd [#allocation6], %s45
      %s47 = sshll.u32 [#allocation7], 4
      %s48 = int_to_ptr.vmem [resolvable:$true] %s47
      %53 = dma.hbm_to_vmem [thread:$0]  %s3, 8192, %s48, [#allocation6], 256, 256, 16
    $region17: #{tpu_custom_call.1} parent=1 // pred_fallthru
      _
    // Predicated region
    $region18: #{tpu_custom_call.1} parent=1 // pred_check
      _
    $region19: #{tpu_custom_call.1} parent=1 // pred_check_branch
      %55 = sbr.rel (0) target = $region21
    $region20: #{tpu_custom_call.1} parent=1 // pred_region
      _
    $region21: #{tpu_custom_call.1} parent=1 // pred_fallthru
      _
    // Predicated region
    $region22: #{tpu_custom_call.1} parent=1 // pred_check
      _
    $region23: #{tpu_custom_call.1} parent=1 // pred_check_branch
      %57 = sbr.rel (0) target = $region25
    $region24: #{tpu_custom_call.1} parent=1 // pred_region
      %s59 = ssub.s32 4096, 4096
      %60 = vsyncadd [#allocation9], %s59
      %s61 = sshll.u32 [#allocation8], 4
      %s62 = int_to_ptr.vmem [resolvable:$true] %s61
      %67 = dma.hbm_to_vmem [thread:$0]  %s5, 4096, %s62, [#allocation9], 128, 128, 8
    $region25: #{tpu_custom_call.1} parent=1 // pred_fallthru
      _
    // Predicated region
    $region26: #{tpu_custom_call.1} parent=1 // pred_check
      _
    $region27: #{tpu_custom_call.1} parent=1 // pred_check_branch
      %69 = sbr.rel (0) target = $region29
    $region28: #{tpu_custom_call.1} parent=1 // pred_region
      _
    $region29: #{tpu_custom_call.1} parent=1 // pred_fallthru
      _
    // Predicated region
    $region30: #{tpu_custom_call.1} parent=1 // pred_check
      _
    $region31: #{tpu_custom_call.1} parent=1 // pred_check_branch
      %71 = sbr.rel (0) target = $region33
    $region32: #{tpu_custom_call.1} parent=1 // pred_region
      %72 = dma.done [#allocation3], 256
    $region33: #{tpu_custom_call.1} parent=1 // pred_fallthru
      _
    // Predicated region
    $region34: #{tpu_custom_call.1} parent=1 // pred_check
      _
    $region35: #{tpu_custom_call.1} parent=1 // pred_check_branch
      %74 = sbr.rel (0) target = $region37
    $region36: #{tpu_custom_call.1} parent=1 // pred_region
      %75 = dma.done [#allocation6], 1024
    $region37: #{tpu_custom_call.1} parent=1 // pred_fallthru
      _
    // Predicated region
    $region38: #{tpu_custom_call.1} parent=1 // pred_check
      _
    $region39: #{tpu_custom_call.1} parent=1 // pred_check_branch
      %77 = sbr.rel (0) target = $region41
    $region40: #{tpu_custom_call.1} parent=1 // pred_region
      %78 = dma.done [#allocation6], 8192
    $region41: #{tpu_custom_call.1} parent=1 // pred_fallthru
      _
    // Predicated region
    $region42: #{tpu_custom_call.1} parent=1 // pred_check
      _
    $region43: #{tpu_custom_call.1} parent=1 // pred_check_branch
      %80 = sbr.rel (0) target = $region45
    $region44: #{tpu_custom_call.1} parent=1 // pred_region
      %81 = dma.done [#allocation9], 4096
    $region45: #{tpu_custom_call.1} parent=1 // pred_fallthru
      _
    %v82 = vld [vmem:[#allocation2] sm:$0xff]
    %v83 = vld [vmem:[#allocation2 + $0x8] sm:$0xff]
    %v84 = vld [vmem:[#allocation5] sm:$0xff]
    %v85 = vld [vmem:[#allocation5 + $0x8] sm:$0xff]
    %v86 = vld [vmem:[#allocation5 + $0x10] sm:$0xff]
    %v87 = vld [vmem:[#allocation5 + $0x18] sm:$0xff]
    %v88 = vld [vmem:[#allocation5 + $0x20] sm:$0xff]
    %v89 = vld [vmem:[#allocation5 + $0x28] sm:$0xff]
    %v90 = vld [vmem:[#allocation5 + $0x30] sm:$0xff]
    %v91 = vld [vmem:[#allocation5 + $0x38] sm:$0xff]
    %v92 = vld [vmem:[%s2] sm:$0x3]
    %v94 = vlaneseq
    %v95 = vshrl.u32 %v94, 7
    %v96 = vsub.s32 0, %v95
    %v97 = vrot.slane %v92, %v96
    %v98 = vlaneseq
    %v99 = vshrl.u32 %v98, 7
    %v100 = vsub.s32 1, %v99
    %v101 = vrot.slane %v92, %v100
    %vm104 = vcmask 261120
    %v106 = vsel %vm104, %v82, 0
    %v109 = vsel %vm104, %v83, 0
    %111 = vmatprep.subr.mxu0 %v85
    %112 = vmatpush1.msra.mxu0 %v84
    %113 = vmatprep.subr.mxu0 %v87
    %114 = vmatpush1.msra.mxu0 %v86
    %115 = vmatprep.subr.mxu0 %v89
    %116 = vmatpush1.msra.mxu0 %v88
    %117 = vmatprep.subr.mxu0 %v91
    %118 = vmatpush1.msra.mxu0 %v90
    %119 = vmatprep.subr.mxu0 0.0
    %120 = vmatpush1.msra.mxu0 0.0
    %121 = vmatprep.subr.mxu0 0.0
    %122 = vmatpush1.msra.mxu0 0.0
    %123 = vmatprep.subr.mxu0 0.0
    %124 = vmatpush1.msra.mxu0 0.0
    %125 = vmatprep.subr.mxu0 0.0
    %126 = vmatpush1.msra.mxu0 0.0
    %127 = vmatprep.subr.mxu0 0.0
    %128 = vmatpush1.msra.mxu0 0.0
    %129 = vmatprep.subr.mxu0 0.0
    %130 = vmatpush1.msra.mxu0 0.0
    %131 = vmatprep.subr.mxu0 0.0
    %132 = vmatpush1.msra.mxu0 0.0
    %133 = vmatprep.subr.mxu0 0.0
    %134 = vmatpush1.msra.mxu0 0.0
    %135 = vmatprep.subr.mxu0 0.0
    %136 = vmatpush1.msra.mxu0 0.0
    %137 = vmatprep.subr.mxu0 0.0
    %138 = vmatpush1.msra.mxu0 0.0
    %139 = vmatprep.subr.mxu0 0.0
    %140 = vmatpush1.msra.mxu0 0.0
    %141 = vmatprep.subr.mxu0 0.0
    %142 = vmatpush1.msra.mxu0 0.0
    %143 = vmatprep.subr.mxu0 0.0
    %144 = vmatpush1.msra.mxu0 0.0
    %145 = vmatprep.subr.mxu0 0.0
    %146 = vmatpush1.msra.mxu0 0.0
    %147 = vmatprep.subr.mxu0 0.0
    %148 = vmatpush1.msra.mxu0 0.0
    %149 = vmatprep.subr.mxu0 0.0
    %150 = vmatpush1.msra.mxu0 0.0
    %151 = vmatprep.subr.mxu0 0.0
    %152 = vmatpush1.msra.mxu0 0.0
    %153 = vmatprep.subr.mxu0 0.0
    %154 = vmatpush1.msra.mxu0 0.0
    %155 = vmatprep.subr.mxu0 0.0
    %156 = vmatpush1.msra.mxu0 0.0
    %157 = vmatprep.subr.mxu0 0.0
    %158 = vmatpush1.msra.mxu0 0.0
    %159 = vmatprep.subr.mxu0 0.0
    %160 = vmatpush1.msra.mxu0 0.0
    %161 = vmatprep.subr.mxu0 0.0
    %162 = vmatpush1.msra.mxu0 0.0
    %163 = vmatprep.subr.mxu0 0.0
    %164 = vmatpush1.msra.mxu0 0.0
    %165 = vmatprep.subr.mxu0 0.0
    %166 = vmatpush1.msra.mxu0 0.0
    %167 = vmatprep.subr.mxu0 0.0
    %168 = vmatpush1.msra.mxu0 0.0
    %169 = vmatprep.subr.mxu0 0.0
    %170 = vmatpush1.msra.mxu0 0.0
    %171 = vmatprep.subr.mxu0 0.0
    %172 = vmatpush1.msra.mxu0 0.0
    %173 = vmatprep.subr.mxu0 0.0
    %174 = vmatpush1.msra.mxu0 0.0
    %175 = vmatprep.mubr.f32.mxu0 0.0
    %176 = vmatmul.mubr.f32.gmra.mrb[0].mxu0 %v106
    %v177 = vpop.f32.mrb[0].mxu0
    %v178 = vadd.f32 %v97, %v177
    %v179 = vpop.f32.mrb[0].mxu0
    %v180 = vadd.f32 %v101, %v179
    %181 = vmatprep.mubr.f32.mxu0 0.0
    %182 = vmatmul.mubr.f32.gmra.mrb[0].mxu0 %v109
    %v183 = vpop.f32.mrb[0].mxu0
    %v184 = vadd.f32 %v97, %v183
    %v185 = vpop.f32.mrb[0].mxu0
    %v186 = vadd.f32 %v101, %v185
    %187 = vdwg.mxu0
    %v188 = vmax.f32 %v178, 0.0
    %v189 = vmax.f32 %v180, 0.0
    %v190 = vmax.f32 %v184, 0.0
    %v191 = vmax.f32 %v186, 0.0
    %v192 = vld [vmem:[#allocation7] sm:$0xff]
    %v193 = vld [vmem:[#allocation7 + $0x8] sm:$0xff]
    %v194 = vld [vmem:[#allocation7 + $0x10] sm:$0xff]
    %v195 = vld [vmem:[#allocation7 + $0x18] sm:$0xff]
    %v196 = vld [vmem:[#allocation7 + $0x20] sm:$0xff]
    %v197 = vld [vmem:[#allocation7 + $0x28] sm:$0xff]
    %v198 = vld [vmem:[#allocation7 + $0x30] sm:$0xff]
    %v199 = vld [vmem:[#allocation7 + $0x38] sm:$0xff]
    %v200 = vld [vmem:[#allocation7 + $0x40] sm:$0xff]
    %v201 = vld [vmem:[#allocation7 + $0x48] sm:$0xff]
    %v202 = vld [vmem:[#allocation7 + $0x50] sm:$0xff]
    %v203 = vld [vmem:[#allocation7 + $0x58] sm:$0xff]
    %v204 = vld [vmem:[#allocation7 + $0x60] sm:$0xff]
    %v205 = vld [vmem:[#allocation7 + $0x68] sm:$0xff]
    %v206 = vld [vmem:[#allocation7 + $0x70] sm:$0xff]
    %v207 = vld [vmem:[#allocation7 + $0x78] sm:$0xff]
    %v208 = vld [vmem:[#allocation7 + $0x80] sm:$0xff]
    %v209 = vld [vmem:[#allocation7 + $0x88] sm:$0xff]
    %v210 = vld [vmem:[#allocation7 + $0x90] sm:$0xff]
    %v211 = vld [vmem:[#allocation7 + $0x98] sm:$0xff]
    %v212 = vld [vmem:[#allocation7 + $0xa0] sm:$0xff]
    %v213 = vld [vmem:[#allocation7 + $0xa8] sm:$0xff]
    %v214 = vld [vmem:[#allocation7 + $0xb0] sm:$0xff]
    %v215 = vld [vmem:[#allocation7 + $0xb8] sm:$0xff]
    %v216 = vld [vmem:[#allocation7 + $0xc0] sm:$0xff]
    %v217 = vld [vmem:[#allocation7 + $0xc8] sm:$0xff]
    %v218 = vld [vmem:[#allocation7 + $0xd0] sm:$0xff]
    %v219 = vld [vmem:[#allocation7 + $0xd8] sm:$0xff]
    %v220 = vld [vmem:[#allocation7 + $0xe0] sm:$0xff]
    %v221 = vld [vmem:[#allocation7 + $0xe8] sm:$0xff]
    %v222 = vld [vmem:[#allocation7 + $0xf0] sm:$0xff]
    %v223 = vld [vmem:[#allocation7 + $0xf8] sm:$0xff]
    %v224 = vld [vmem:[#allocation7 + $0x100] sm:$0xff]
    %v225 = vld [vmem:[#allocation7 + $0x108] sm:$0xff]
    %v226 = vld [vmem:[#allocation7 + $0x110] sm:$0xff]
    %v227 = vld [vmem:[#allocation7 + $0x118] sm:$0xff]
    %v228 = vld [vmem:[#allocation7 + $0x120] sm:$0xff]
    %v229 = vld [vmem:[#allocation7 + $0x128] sm:$0xff]
    %v230 = vld [vmem:[#allocation7 + $0x130] sm:$0xff]
    %v231 = vld [vmem:[#allocation7 + $0x138] sm:$0xff]
    %v232 = vld [vmem:[#allocation7 + $0x140] sm:$0xff]
    %v233 = vld [vmem:[#allocation7 + $0x148] sm:$0xff]
    %v234 = vld [vmem:[#allocation7 + $0x150] sm:$0xff]
    %v235 = vld [vmem:[#allocation7 + $0x158] sm:$0xff]
    %v236 = vld [vmem:[#allocation7 + $0x160] sm:$0xff]
    %v237 = vld [vmem:[#allocation7 + $0x168] sm:$0xff]
    %v238 = vld [vmem:[#allocation7 + $0x170] sm:$0xff]
    %v239 = vld [vmem:[#allocation7 + $0x178] sm:$0xff]
    %v240 = vld [vmem:[#allocation7 + $0x180] sm:$0xff]
    %v241 = vld [vmem:[#allocation7 + $0x188] sm:$0xff]
    %v242 = vld [vmem:[#allocation7 + $0x190] sm:$0xff]
    %v243 = vld [vmem:[#allocation7 + $0x198] sm:$0xff]
    %v244 = vld [vmem:[#allocation7 + $0x1a0] sm:$0xff]
    %v245 = vld [vmem:[#allocation7 + $0x1a8] sm:$0xff]
    %v246 = vld [vmem:[#allocation7 + $0x1b0] sm:$0xff]
    %v247 = vld [vmem:[#allocation7 + $0x1b8] sm:$0xff]
    %v248 = vld [vmem:[#allocation7 + $0x1c0] sm:$0xff]
    %v249 = vld [vmem:[#allocation7 + $0x1c8] sm:$0xff]
    %v250 = vld [vmem:[#allocation7 + $0x1d0] sm:$0xff]
    %v251 = vld [vmem:[#allocation7 + $0x1d8] sm:$0xff]
    %v252 = vld [vmem:[#allocation7 + $0x1e0] sm:$0xff]
    %v253 = vld [vmem:[#allocation7 + $0x1e8] sm:$0xff]
    %v254 = vld [vmem:[#allocation7 + $0x1f0] sm:$0xff]
    %v255 = vld [vmem:[#allocation7 + $0x1f8] sm:$0xff]
    %v256 = vld [vmem:[%s4] sm:$0x3]
    %v258 = vlaneseq
    %v259 = vshrl.u32 %v258, 7
    %v260 = vsub.s32 0, %v259
    %v261 = vrot.slane %v256, %v260
    %v262 = vlaneseq
    %v263 = vshrl.u32 %v262, 7
    %v264 = vsub.s32 1, %v263
    %v265 = vrot.slane %v256, %v264
    %268 = vmatprep.subr.mxu0 %v193
    %269 = vmatpush1.msra.mxu0 %v192
    %270 = vmatprep.subr.mxu0 %v195
    %271 = vmatpush1.msra.mxu0 %v194
    %272 = vmatprep.subr.mxu0 %v197
    %273 = vmatpush1.msra.mxu0 %v196
    %274 = vmatprep.subr.mxu0 %v199
    %275 = vmatpush1.msra.mxu0 %v198
    %276 = vmatprep.subr.mxu0 %v201
    %277 = vmatpush1.msra.mxu0 %v200
    %278 = vmatprep.subr.mxu0 %v203
    %279 = vmatpush1.msra.mxu0 %v202
    %280 = vmatprep.subr.mxu0 %v205
    %281 = vmatpush1.msra.mxu0 %v204
    %282 = vmatprep.subr.mxu0 %v207
    %283 = vmatpush1.msra.mxu0 %v206
    %284 = vmatprep.subr.mxu0 %v209
    %285 = vmatpush1.msra.mxu0 %v208
    %286 = vmatprep.subr.mxu0 %v211
    %287 = vmatpush1.msra.mxu0 %v210
    %288 = vmatprep.subr.mxu0 %v213
    %289 = vmatpush1.msra.mxu0 %v212
    %290 = vmatprep.subr.mxu0 %v215
    %291 = vmatpush1.msra.mxu0 %v214
    %292 = vmatprep.subr.mxu0 %v217
    %293 = vmatpush1.msra.mxu0 %v216
    %294 = vmatprep.subr.mxu0 %v219
    %295 = vmatpush1.msra.mxu0 %v218
    %296 = vmatprep.subr.mxu0 %v221
    %297 = vmatpush1.msra.mxu0 %v220
    %298 = vmatprep.subr.mxu0 %v223
    %299 = vmatpush1.msra.mxu0 %v222
    %300 = vmatprep.subr.mxu0 %v225
    %301 = vmatpush1.msra.mxu0 %v224
    %302 = vmatprep.subr.mxu0 %v227
    %303 = vmatpush1.msra.mxu0 %v226
    %304 = vmatprep.subr.mxu0 %v229
    %305 = vmatpush1.msra.mxu0 %v228
    %306 = vmatprep.subr.mxu0 %v231
    %307 = vmatpush1.msra.mxu0 %v230
    %308 = vmatprep.subr.mxu0 %v233
    %309 = vmatpush1.msra.mxu0 %v232
    %310 = vmatprep.subr.mxu0 %v235
    %311 = vmatpush1.msra.mxu0 %v234
    %312 = vmatprep.subr.mxu0 %v237
    %313 = vmatpush1.msra.mxu0 %v236
    %314 = vmatprep.subr.mxu0 %v239
    %315 = vmatpush1.msra.mxu0 %v238
    %316 = vmatprep.subr.mxu0 %v241
    %317 = vmatpush1.msra.mxu0 %v240
    %318 = vmatprep.subr.mxu0 %v243
    %319 = vmatpush1.msra.mxu0 %v242
    %320 = vmatprep.subr.mxu0 %v245
    %321 = vmatpush1.msra.mxu0 %v244
    %322 = vmatprep.subr.mxu0 %v247
    %323 = vmatpush1.msra.mxu0 %v246
    %324 = vmatprep.subr.mxu0 %v249
    %325 = vmatpush1.msra.mxu0 %v248
    %326 = vmatprep.subr.mxu0 %v251
    %327 = vmatpush1.msra.mxu0 %v250
    %328 = vmatprep.subr.mxu0 %v253
    %329 = vmatpush1.msra.mxu0 %v252
    %330 = vmatprep.subr.mxu0 %v255
    %331 = vmatpush1.msra.mxu0 %v254
    %332 = vmatprep.mubr.f32.mxu0 %v189
    %333 = vmatmul.mubr.f32.gmra.mrb[0].mxu0 %v188
    %v334 = vpop.f32.mrb[0].mxu0
    %v335 = vadd.f32 %v261, %v334
    %v336 = vpop.f32.mrb[0].mxu0
    %v337 = vadd.f32 %v265, %v336
    %338 = vmatprep.mubr.f32.mxu0 %v191
    %339 = vmatmul.mubr.f32.gmra.mrb[0].mxu0 %v190
    %v340 = vpop.f32.mrb[0].mxu0
    %v341 = vadd.f32 %v261, %v340
    %v342 = vpop.f32.mrb[0].mxu0
    %v343 = vadd.f32 %v265, %v342
    %344 = vdwg.mxu0
    %v345 = vmax.f32 %v335, 0.0
    %v346 = vmax.f32 %v337, 0.0
    %v347 = vmax.f32 %v341, 0.0
    %v348 = vmax.f32 %v343, 0.0
    %v349 = vld [vmem:[#allocation8] sm:$0xff]
    %v350 = vld [vmem:[#allocation8 + $0x8] sm:$0xff]
    %v351 = vld [vmem:[#allocation8 + $0x10] sm:$0xff]
    %v352 = vld [vmem:[#allocation8 + $0x18] sm:$0xff]
    %v353 = vld [vmem:[#allocation8 + $0x20] sm:$0xff]
    %v354 = vld [vmem:[#allocation8 + $0x28] sm:$0xff]
    %v355 = vld [vmem:[#allocation8 + $0x30] sm:$0xff]
    %v356 = vld [vmem:[#allocation8 + $0x38] sm:$0xff]
    %v357 = vld [vmem:[#allocation8 + $0x40] sm:$0xff]
    %v358 = vld [vmem:[#allocation8 + $0x48] sm:$0xff]
    %v359 = vld [vmem:[#allocation8 + $0x50] sm:$0xff]
    %v360 = vld [vmem:[#allocation8 + $0x58] sm:$0xff]
    %v361 = vld [vmem:[#allocation8 + $0x60] sm:$0xff]
    %v362 = vld [vmem:[#allocation8 + $0x68] sm:$0xff]
    %v363 = vld [vmem:[#allocation8 + $0x70] sm:$0xff]
    %v364 = vld [vmem:[#allocation8 + $0x78] sm:$0xff]
    %v365 = vld [vmem:[#allocation8 + $0x80] sm:$0xff]
    %v366 = vld [vmem:[#allocation8 + $0x88] sm:$0xff]
    %v367 = vld [vmem:[#allocation8 + $0x90] sm:$0xff]
    %v368 = vld [vmem:[#allocation8 + $0x98] sm:$0xff]
    %v369 = vld [vmem:[#allocation8 + $0xa0] sm:$0xff]
    %v370 = vld [vmem:[#allocation8 + $0xa8] sm:$0xff]
    %v371 = vld [vmem:[#allocation8 + $0xb0] sm:$0xff]
    %v372 = vld [vmem:[#allocation8 + $0xb8] sm:$0xff]
    %v373 = vld [vmem:[#allocation8 + $0xc0] sm:$0xff]
    %v374 = vld [vmem:[#allocation8 + $0xc8] sm:$0xff]
    %v375 = vld [vmem:[#allocation8 + $0xd0] sm:$0xff]
    %v376 = vld [vmem:[#allocation8 + $0xd8] sm:$0xff]
    %v377 = vld [vmem:[#allocation8 + $0xe0] sm:$0xff]
    %v378 = vld [vmem:[#allocation8 + $0xe8] sm:$0xff]
    %v379 = vld [vmem:[#allocation8 + $0xf0] sm:$0xff]
    %v380 = vld [vmem:[#allocation8 + $0xf8] sm:$0xff]
    %v381 = vld [vmem:[%s6] sm:$0x1]
    %v383 = vlaneseq
    %v384 = vshrl.u32 %v383, 7
    %v385 = vsub.s32 0, %v384
    %v386 = vrot.slane %v381, %v385
    %388 = vmatprep.subr.mxu0 0.0
    %389 = vmatpush1.msra.mxu0 %v349
    %390 = vmatprep.subr.mxu0 0.0
    %391 = vmatpush1.msra.mxu0 %v350
    %392 = vmatprep.subr.mxu0 0.0
    %393 = vmatpush1.msra.mxu0 %v351
    %394 = vmatprep.subr.mxu0 0.0
    %395 = vmatpush1.msra.mxu0 %v352
    %396 = vmatprep.subr.mxu0 0.0
    %397 = vmatpush1.msra.mxu0 %v353
    %398 = vmatprep.subr.mxu0 0.0
    %399 = vmatpush1.msra.mxu0 %v354
    %400 = vmatprep.subr.mxu0 0.0
    %401 = vmatpush1.msra.mxu0 %v355
    %402 = vmatprep.subr.mxu0 0.0
    %403 = vmatpush1.msra.mxu0 %v356
    %404 = vmatprep.subr.mxu0 0.0
    %405 = vmatpush1.msra.mxu0 %v357
    %406 = vmatprep.subr.mxu0 0.0
    %407 = vmatpush1.msra.mxu0 %v358
    %408 = vmatprep.subr.mxu0 0.0
    %409 = vmatpush1.msra.mxu0 %v359
    %410 = vmatprep.subr.mxu0 0.0
    %411 = vmatpush1.msra.mxu0 %v360
    %412 = vmatprep.subr.mxu0 0.0
    %413 = vmatpush1.msra.mxu0 %v361
    %414 = vmatprep.subr.mxu0 0.0
    %415 = vmatpush1.msra.mxu0 %v362
    %416 = vmatprep.subr.mxu0 0.0
    %417 = vmatpush1.msra.mxu0 %v363
    %418 = vmatprep.subr.mxu0 0.0
    %419 = vmatpush1.msra.mxu0 %v364
    %420 = vmatprep.subr.mxu0 0.0
    %421 = vmatpush1.msra.mxu0 %v365
    %422 = vmatprep.subr.mxu0 0.0
    %423 = vmatpush1.msra.mxu0 %v366
    %424 = vmatprep.subr.mxu0 0.0
    %425 = vmatpush1.msra.mxu0 %v367
    %426 = vmatprep.subr.mxu0 0.0
    %427 = vmatpush1.msra.mxu0 %v368
    %428 = vmatprep.subr.mxu0 0.0
    %429 = vmatpush1.msra.mxu0 %v369
    %430 = vmatprep.subr.mxu0 0.0
    %431 = vmatpush1.msra.mxu0 %v370
    %432 = vmatprep.subr.mxu0 0.0
    %433 = vmatpush1.msra.mxu0 %v371
    %434 = vmatprep.subr.mxu0 0.0
    %435 = vmatpush1.msra.mxu0 %v372
    %436 = vmatprep.subr.mxu0 0.0
    %437 = vmatpush1.msra.mxu0 %v373
    %438 = vmatprep.subr.mxu0 0.0
    %439 = vmatpush1.msra.mxu0 %v374
    %440 = vmatprep.subr.mxu0 0.0
    %441 = vmatpush1.msra.mxu0 %v375
    %442 = vmatprep.subr.mxu0 0.0
    %443 = vmatpush1.msra.mxu0 %v376
    %444 = vmatprep.subr.mxu0 0.0
    %445 = vmatpush1.msra.mxu0 %v377
    %446 = vmatprep.subr.mxu0 0.0
    %447 = vmatpush1.msra.mxu0 %v378
    %448 = vmatprep.subr.mxu0 0.0
    %449 = vmatpush1.msra.mxu0 %v379
    %450 = vmatprep.subr.mxu0 0.0
    %451 = vmatpush1.msra.mxu0 %v380
    %452 = vmatprep.mubr.f32.mxu0 %v346
    %453 = vmatmul.mubr.f32.gmra.mrb[0].mxu0 %v345
    %v454 = vpop.f32.mrb[0].mxu0
    %v455 = vadd.f32 %v386, %v454
    %v456 = vpop.f32.mrb[0].mxu0
    %457 = vmatprep.mubr.f32.mxu0 %v348
    %458 = vmatmul.mubr.f32.gmra.mrb[0].mxu0 %v347
    %v459 = vpop.f32.mrb[0].mxu0
    %v460 = vadd.f32 %v386, %v459
    %v461 = vpop.f32.mrb[0].mxu0
    %462 = vdwg.mxu0
    %v463 = vtanh.pop %v455
    %v464 = vtanh.pop %v460
    %v465 = vmul.f32 %v463, 2.0
    %v466 = vmul.f32 %v464, 2.0
    %467 = vxpose.xlu0.b32.start [1/16] %v465, 128
    %468 = vxpose.xlu0.b32.cont [2/16] %v466, 128
    %469 = vxpose.xlu0.b32.cont [3/16] 0.0, 128
    %470 = vxpose.xlu0.b32.cont [4/16] 0.0, 128
    %471 = vxpose.xlu0.b32.cont [5/16] 0.0, 128
    %472 = vxpose.xlu0.b32.cont [6/16] 0.0, 128
    %473 = vxpose.xlu0.b32.cont [7/16] 0.0, 128
    %474 = vxpose.xlu0.b32.cont [8/16] 0.0, 128
    %475 = vxpose.xlu0.b32.cont [9/16] 0.0, 128
    %476 = vxpose.xlu0.b32.cont [10/16] 0.0, 128
    %477 = vxpose.xlu0.b32.cont [11/16] 0.0, 128
    %478 = vxpose.xlu0.b32.cont [12/16] 0.0, 128
    %479 = vxpose.xlu0.b32.cont [13/16] 0.0, 128
    %480 = vxpose.xlu0.b32.cont [14/16] 0.0, 128
    %481 = vxpose.xlu0.b32.cont [15/16] 0.0, 128
    %482 = vxpose.xlu0.b32.end [16/16] 0.0, 128
    %v483 = vpop.trf.xlu0
    %v484 = vpop.trf.xlu0
    %v485 = vpop.trf.xlu0
    %v486 = vpop.trf.xlu0
    %v487 = vpop.trf.xlu0
    %v488 = vpop.trf.xlu0
    %v489 = vpop.trf.xlu0
    %v490 = vpop.trf.xlu0
    %v491 = vpop.trf.xlu0
    %v492 = vpop.trf.xlu0
    %v493 = vpop.trf.xlu0
    %v494 = vpop.trf.xlu0
    %v495 = vpop.trf.xlu0
    %v496 = vpop.trf.xlu0
    %v497 = vpop.trf.xlu0
    %v498 = vpop.trf.xlu0
    %vm499 = vcmask 130048
    %500 = vst.msk [vmem:[#allocation10] sm:$0xff] %vm499, %v483
    // Predicated region
    $region46: #{tpu_custom_call.1} parent=1 // pred_check
      _
    $region47: #{tpu_custom_call.1} parent=1 // pred_check_branch
      %502 = sbr.rel (0) target = $region49
    $region48: #{tpu_custom_call.1} parent=1 // pred_region
      %s504 = ssub.s32 128, 128
      %505 = vsyncadd [#allocation4], %s504
      %s507 = sshll.u32 [#allocation10], 4
      %s508 = int_to_ptr.vmem [resolvable:$true] %s507
      %510 = dma.vmem_to_hbm [thread:$0]  %s508, 128, %s7, [#allocation4]
    $region49: #{tpu_custom_call.1} parent=1 // pred_fallthru
      _
    // Predicated region
    $region50: #{tpu_custom_call.1} parent=1 // pred_check
      _
    $region51: #{tpu_custom_call.1} parent=1 // pred_check_branch
      %512 = sbr.rel (0) target = $region53
    $region52: #{tpu_custom_call.1} parent=1 // pred_region
      %513 = dma.done [#allocation4], 128
    $region53: #{tpu_custom_call.1} parent=1 // pred_fallthru
      _
    %514 = vsyncpa [#allocation3], 1
    %515 = vsyncpa [#allocation6], 1
    %516 = vsyncpa [#allocation9], 1
    %517 = vsyncpa [#allocation4], 1

</llo_original>
